<compile_context>
chip_gen: v7x
topology: tpu7x:2x2x1
jax: 0.10.0
libtpu: 0.0.40
codegen_flags: <defaults>
</compile_context>

<pallas_src>
import functools

import jax
import jax.numpy as jnp
from jax.experimental import pallas as pl
from jax.experimental.pallas import tpu as pltpu


_LANE = 128
_SUBLANE = 8


def _round_up(x, m):
    return ((x + m - 1) // m) * m


def _cdiv(a, b):
    return (a + b - 1) // b


def _fused_mlp_kernel(x_ref, *refs, n_layers, activation, output_activation,
                      scale):
    """Chained y = act(x @ W + b) for all layers; final layer optionally scaled.

    refs = (w0, b0, w1, b1, ..., w{L-1}, b{L-1}, o_ref); every tile is
    VMEM-resident for this batch-grid step, so intermediates never touch HBM.
    """
    o_ref = refs[2 * n_layers]
    x = x_ref[...].astype(jnp.float32)
    for i in range(n_layers):
        w = refs[2 * i][...]                       # [Din_pad, Dout_pad]
        b = refs[2 * i + 1][...][:1, :]            # full-tile load, use row 0
        y = jnp.dot(x.astype(w.dtype), w, preferred_element_type=jnp.float32)
        y = y + b.astype(jnp.float32)              # broadcasts over batch rows
        if i < n_layers - 1:
            if activation == "tanh":
                y = jnp.tanh(y)
            elif activation == "relu":
                y = jnp.maximum(y, 0.0)
        else:
            if output_activation == "tanh":
                y = jnp.tanh(y)
            elif output_activation == "relu":
                y = jnp.maximum(y, 0.0)
            # Only reached when output_activation is not None; otherwise the
            # scale is folded into the last layer's weights at construction.
            if scale != 1.0:
                y = y * jnp.float32(scale)
        x = y
    o_ref[...] = x.astype(o_ref.dtype)


class MLPPallas:
    """JAX/Pallas replica of fireup MLP: tanh hidden layers, linear output."""

    _MAX_BATCH_TILE = 256  # rows per grid step for large batches

    def __init__(self, layers, key, activation="tanh", output_activation=None,
                 output_scale=1.0, output_squeeze=False,
                 param_dtype=jnp.float32):
        assert len(layers) >= 2
        self.activation = activation
        self.output_activation = output_activation
        self.output_scale = float(output_scale)
        self.output_squeeze = output_squeeze
        self.param_dtype = jnp.dtype(param_dtype)

        self.dims = [int(d) for d in layers]              # true layer widths
        self.dims_pad = [_round_up(d, _LANE) for d in self.dims]

        # output_scale can be folded into the last Linear iff no output
        # activation sits between the matmul and the scale.
        self.fold_scale = output_activation is None
        self.kernel_scale = 1.0 if self.fold_scale else self.output_scale

        self.params = []          # PyTorch layout (used by the reference check)
        self.params_padded = []   # pre-transposed, padded, kernel dtype

        n_layers = len(self.dims) - 1
        for i in range(n_layers):
            in_dim, out_dim = self.dims[i], self.dims[i + 1]
            key, wkey = jax.random.split(key)
            # nn.Linear default weight init: U(-1/sqrt(in), 1/sqrt(in)); bias=0.
            bound = 1.0 / jnp.sqrt(jnp.float32(in_dim))
            w = jax.random.uniform(wkey, (out_dim, in_dim), jnp.float32,
                                   minval=-bound, maxval=bound)
            b = jnp.zeros((out_dim,), jnp.float32)
            self.params.append((w, b))

            fold = (self.output_scale
                    if (self.fold_scale and i == n_layers - 1) else 1.0)
            in_pad, out_pad = self.dims_pad[i], self.dims_pad[i + 1]
            wt = jnp.zeros((in_pad, out_pad), jnp.float32)
            wt = wt.at[:in_dim, :out_dim].set(w.T * fold)   # [Din_pad, Dout_pad]
            # Bias stored as a full sublane tile (identical rows) -> unmasked
            # (8, out_pad) load in the kernel.
            bp = jnp.zeros((_SUBLANE, out_pad), jnp.float32)
            bp = bp.at[:, :out_dim].set(
                jnp.broadcast_to(b * fold, (_SUBLANE, out_dim)))
            self.params_padded.append((wt.astype(self.param_dtype),
                                       bp.astype(self.param_dtype)))

    # ------------------------------------------------------------------ tiling
    def _choose_batch_tile(self, B):
        """Pick a sublane-aligned batch tile minimising padding waste while
        keeping >= 2 'parallel' grid steps when possible (v7x megacore)."""
        b8 = _round_up(max(int(B), 1), _SUBLANE)
        if b8 <= _SUBLANE:
            return _SUBLANE
        candidates = {t for t in (256, 128, 64, 32, 16, 8)
                      if t <= self._MAX_BATCH_TILE}
        half = _round_up(_cdiv(b8, 2), _SUBLANE)   # exact two-way split
        if half <= self._MAX_BATCH_TILE:
            candidates.add(half)
        best = None
        for tb in sorted(candidates, reverse=True):
            steps = _cdiv(b8, tb)
            waste = steps * tb - B                 # padded rows of dead work
            single_step = 1 if steps == 1 else 0   # would idle one v7x core
            score = (single_step, waste + _SUBLANE * (steps - 1), -tb)
            if best is None or score < best[0]:
                best = (score, tb)
        return best[1]

    def _vmem_limit_bytes(self, tb):
        pbytes = self.param_dtype.itemsize
        total = 2 * tb * self.dims_pad[0] * pbytes        # input, double-buffered
        total += 2 * tb * self.dims_pad[-1] * 4           # output, double-buffered
        for li in range(len(self.dims_pad) - 1):          # single-buffered params
            ip, op = self.dims_pad[li], self.dims_pad[li + 1]
            total += (ip * op + _SUBLANE * op) * pbytes
        total += 3 * tb * max(self.dims_pad) * 4          # live f32 intermediates
        total = int(total * 1.25) + (4 << 20)             # compiler scratch headroom
        return max(32 << 20, min(total, 128 << 20))

    # ----------------------------------------------------------------- forward
    def __call__(self, x):
        B, Din = x.shape
        assert Din == self.dims[0], (Din, self.dims[0])
        n_layers = len(self.params_padded)
        din_pad, dout_pad = self.dims_pad[0], self.dims_pad[-1]
        dout = self.dims[-1]

        tb = self._choose_batch_tile(B)
        b_pad = _round_up(B, tb)

        kdtype = self.param_dtype
        # Skip the host-side repack (extra HBM round-trip) when already aligned.
        # Padded feature columns hit zero weight rows and padded batch rows are
        # sliced away, so padding never changes results.
        if B == b_pad and Din == din_pad and x.dtype == kdtype:
            xp = x
        else:
            xp = jnp.pad(x.astype(kdtype),
                         ((0, b_pad - B), (0, din_pad - Din)))

        flat_params = []
        for wt, bp in self.params_padded:
            flat_params.extend([wt, bp])

        kernel = functools.partial(
            _fused_mlp_kernel,
            n_layers=n_layers,
            activation=self.activation,
            output_activation=self.output_activation,
            scale=self.kernel_scale,
        )

        try:
            out = self._run(kernel, xp, flat_params, x.dtype, tb, b_pad,
                            single_buffer_params=True)
        except Exception:
            # Fallback for jax builds where pl.Buffered / pipeline_mode is not
            # accepted by the TPU pallas_call pipeline.
            out = self._run(kernel, xp, flat_params, x.dtype, tb, b_pad,
                            single_buffer_params=False)

        if b_pad != B or dout_pad != dout:
            out = out[:B, :dout]
        if self.output_squeeze:
            out = jnp.squeeze(out)
        return out

    def _run(self, kernel, xp, flat_params, out_dtype, tb, b_pad,
             single_buffer_params):
        din_pad, dout_pad = self.dims_pad[0], self.dims_pad[-1]

        def param_spec(shape):
            if single_buffer_params:
                # Grid-invariant operand: one VMEM buffer is enough.
                return pl.BlockSpec(shape, lambda i: (0, 0),
                                    memory_space=pltpu.VMEM,
                                    pipeline_mode=pl.Buffered(1))
            return pl.BlockSpec(shape, lambda i: (0, 0),
                                memory_space=pltpu.VMEM)

        in_specs = [pl.BlockSpec((tb, din_pad), lambda i: (i, 0),
                                 memory_space=pltpu.VMEM)]
        for li in range(len(self.params_padded)):
            ip, op = self.dims_pad[li], self.dims_pad[li + 1]
            in_specs.append(param_spec((ip, op)))        # weight
            in_specs.append(param_spec((_SUBLANE, op)))  # bias tile

        return pl.pallas_call(
            kernel,
            out_shape=jax.ShapeDtypeStruct((b_pad, dout_pad), out_dtype),
            grid=(b_pad // tb,),
            in_specs=in_specs,
            out_specs=pl.BlockSpec((tb, dout_pad), lambda i: (i, 0),
                                   memory_space=pltpu.VMEM),
            compiler_params=pltpu.CompilerParams(
                dimension_semantics=("parallel",),
                vmem_limit_bytes=self._vmem_limit_bytes(tb)),
        )(xp, *flat_params)


def _reference_mlp(mlp, x):
    """Pure-JAX reference of the same forward for a sanity check."""
    y = x.astype(jnp.float32)
    for w, b in mlp.params[:-1]:
        z = y @ w.T + b
        y = jnp.tanh(z) if mlp.activation == "tanh" else jnp.maximum(z, 0.0)
    w, b = mlp.params[-1]
    y = y @ w.T + b
    if mlp.output_activation == "tanh":
        y = jnp.tanh(y)
    elif mlp.output_activation == "relu":
        y = jnp.maximum(y, 0.0)
    y = y * mlp.output_scale
    if mlp.output_squeeze:
        y = jnp.squeeze(y)
    return y


if __name__ == "__main__":
    key = jax.random.PRNGKey(0)

    # Case 1: MLP([16, 32, 32, 8]), tanh hidden, linear output, scale=2.0
    # (exercises the folded-scale path; tiny batch -> single grid step).
    key, k1, x1key = jax.random.split(key, 3)
    b1, layers1 = 4, (16, 32, 32, 8)
    x1 = jax.random.normal(x1key, (b1, layers1[0]), jnp.float32)
    mlp1 = MLPPallas(layers1, k1, activation="tanh", output_activation=None,
                     output_scale=2.0, output_squeeze=False)
    out1 = jax.block_until_ready(mlp1(x1))
    ref1 = _reference_mlp(mlp1, x1)
    assert out1.shape == (b1, layers1[-1]), out1.shape
    assert jnp.allclose(out1, ref1, atol=1e-4, rtol=1e-4), "case1 mismatch"

    # Case 2: batch not sublane-aligned -> multi-step 'parallel' grid + padding.
    key, k2, x2key = jax.random.split(key, 3)
    b2, layers2 = 20, (16, 64, 8)
    x2 = jax.random.normal(x2key, (b2, layers2[0]), jnp.float32)
    mlp2 = MLPPallas(layers2, k2, activation="tanh", output_activation=None,
                     output_scale=1.0, output_squeeze=False)
    out2 = jax.block_until_ready(mlp2(x2))
    ref2 = _reference_mlp(mlp2, x2)
    assert out2.shape == (b2, layers2[-1]), out2.shape
    assert jnp.allclose(out2, ref2, atol=1e-4, rtol=1e-4), "case2 mismatch"

    print("KERNEL_OK")
</pallas_src>

<mosaic_0001>
module attributes {stable_mosaic.version = 11 : i64} {
  func.func @_fused_mlp_kernel(%arg0: i32, %arg1: memref<8x128xf32, #tpu.memory_space<vmem>>, %arg2: memref<128x128xf32, #tpu.memory_space<vmem>>, %arg3: memref<8x128xf32, #tpu.memory_space<vmem>>, %arg4: memref<128x128xf32, #tpu.memory_space<vmem>>, %arg5: memref<8x128xf32, #tpu.memory_space<vmem>>, %arg6: memref<128x128xf32, #tpu.memory_space<vmem>>, %arg7: memref<8x128xf32, #tpu.memory_space<vmem>>, %arg8: memref<8x128xf32, #tpu.memory_space<vmem>>) attributes {dimension_semantics = [#tpu.dimension_semantics<parallel>], iteration_bounds = array<i64: 1>, scalar_prefetch = 0 : i64, scratch_operands = 0 : i64, tpu.core_type = #tpu.core_type<tc>, window_params = [{transform_indices = @transform_0, window_bounds = array<i64: 8, 128>}, {pipeline_mode = #tpu.pipeline_mode<synchronous>, transform_indices = @transform_1, window_bounds = array<i64: 128, 128>}, {pipeline_mode = #tpu.pipeline_mode<synchronous>, transform_indices = @transform_2, window_bounds = array<i64: 8, 128>}, {pipeline_mode = #tpu.pipeline_mode<synchronous>, transform_indices = @transform_3, window_bounds = array<i64: 128, 128>}, {pipeline_mode = #tpu.pipeline_mode<synchronous>, transform_indices = @transform_4, window_bounds = array<i64: 8, 128>}, {pipeline_mode = #tpu.pipeline_mode<synchronous>, transform_indices = @transform_5, window_bounds = array<i64: 128, 128>}, {pipeline_mode = #tpu.pipeline_mode<synchronous>, transform_indices = @transform_6, window_bounds = array<i64: 8, 128>}, {transform_indices = @transform_7, window_bounds = array<i64: 8, 128>}]} {
    %c0 = arith.constant 0 : index
    %c0_0 = arith.constant 0 : index
    %0 = vector.load %arg1[%c0, %c0_0] : memref<8x128xf32, #tpu.memory_space<vmem>>, vector<8x128xf32>
    %c0_1 = arith.constant 0 : index
    %c0_2 = arith.constant 0 : index
    %1 = vector.load %arg2[%c0_1, %c0_2] : memref<128x128xf32, #tpu.memory_space<vmem>>, vector<128x128xf32>
    %c0_3 = arith.constant 0 : index
    %c0_4 = arith.constant 0 : index
    %2 = vector.load %arg3[%c0_3, %c0_4] : memref<8x128xf32, #tpu.memory_space<vmem>>, vector<8x128xf32>
    %3 = vector.extract_strided_slice %2 {offsets = [0, 0], sizes = [1, 128], strides = [1, 1]} : vector<8x128xf32> to vector<1x128xf32>
    %cst = arith.constant dense<0.000000e+00> : vector<8x128xf32>
    %4 = tpu.matmul %0, %1, %cst {dimension_numbers = #tpu.dot_dimension_numbers<[1], [0], [0], [1], [0, 0, 1, 1], [], []>} : vector<8x128xf32>, vector<128x128xf32>, vector<8x128xf32> -> vector<8x128xf32>
    %5 = vector.broadcast %3 : vector<1x128xf32> to vector<8x128xf32>
    %6 = arith.addf %4, %5 : vector<8x128xf32>
    %7 = math.tanh %6 : vector<8x128xf32>
    %c0_5 = arith.constant 0 : index
    %c0_6 = arith.constant 0 : index
    %8 = vector.load %arg4[%c0_5, %c0_6] : memref<128x128xf32, #tpu.memory_space<vmem>>, vector<128x128xf32>
    %c0_7 = arith.constant 0 : index
    %c0_8 = arith.constant 0 : index
    %9 = vector.load %arg5[%c0_7, %c0_8] : memref<8x128xf32, #tpu.memory_space<vmem>>, vector<8x128xf32>
    %10 = vector.extract_strided_slice %9 {offsets = [0, 0], sizes = [1, 128], strides = [1, 1]} : vector<8x128xf32> to vector<1x128xf32>
    %cst_9 = arith.constant dense<0.000000e+00> : vector<8x128xf32>
    %11 = tpu.matmul %7, %8, %cst_9 {dimension_numbers = #tpu.dot_dimension_numbers<[1], [0], [0], [1], [0, 0, 1, 1], [], []>} : vector<8x128xf32>, vector<128x128xf32>, vector<8x128xf32> -> vector<8x128xf32>
    %12 = vector.broadcast %10 : vector<1x128xf32> to vector<8x128xf32>
    %13 = arith.addf %11, %12 : vector<8x128xf32>
    %14 = math.tanh %13 : vector<8x128xf32>
    %c0_10 = arith.constant 0 : index
    %c0_11 = arith.constant 0 : index
    %15 = vector.load %arg6[%c0_10, %c0_11] : memref<128x128xf32, #tpu.memory_space<vmem>>, vector<128x128xf32>
    %c0_12 = arith.constant 0 : index
    %c0_13 = arith.constant 0 : index
    %16 = vector.load %arg7[%c0_12, %c0_13] : memref<8x128xf32, #tpu.memory_space<vmem>>, vector<8x128xf32>
    %17 = vector.extract_strided_slice %16 {offsets = [0, 0], sizes = [1, 128], strides = [1, 1]} : vector<8x128xf32> to vector<1x128xf32>
    %cst_14 = arith.constant dense<0.000000e+00> : vector<8x128xf32>
    %18 = tpu.matmul %14, %15, %cst_14 {dimension_numbers = #tpu.dot_dimension_numbers<[1], [0], [0], [1], [0, 0, 1, 1], [], []>} : vector<8x128xf32>, vector<128x128xf32>, vector<8x128xf32> -> vector<8x128xf32>
    %19 = vector.broadcast %17 : vector<1x128xf32> to vector<8x128xf32>
    %20 = arith.addf %18, %19 : vector<8x128xf32>
    %c0_15 = arith.constant 0 : index
    %c0_16 = arith.constant 0 : index
    %21 = vector.load %arg8[%c0_15, %c0_16] : memref<8x128xf32, #tpu.memory_space<vmem>>, vector<8x128xf32>
    tpu.vector_store %arg8[%c0_15, %c0_16], %20 {strides = array<i32>} : memref<8x128xf32, #tpu.memory_space<vmem>>, vector<8x128xf32>,
    return
  }
  func.func @transform_0(%arg0: i32) -> (i32, i32) {
    %c0_i32 = arith.constant 0 : i32
    %c0_i32_0 = arith.constant 0 : i32
    return %arg0, %c0_i32 : i32, i32
  }
  func.func @transform_1(%arg0: i32) -> (i32, i32) {
    %c0_i32 = arith.constant 0 : i32
    %c0_i32_0 = arith.constant 0 : i32
    %c0_i32_1 = arith.constant 0 : i32
    return %c0_i32, %c0_i32_0 : i32, i32
  }
  func.func @transform_2(%arg0: i32) -> (i32, i32) {
    %c0_i32 = arith.constant 0 : i32
    %c0_i32_0 = arith.constant 0 : i32
    %c0_i32_1 = arith.constant 0 : i32
    return %c0_i32, %c0_i32_0 : i32, i32
  }
  func.func @transform_3(%arg0: i32) -> (i32, i32) {
    %c0_i32 = arith.constant 0 : i32
    %c0_i32_0 = arith.constant 0 : i32
    %c0_i32_1 = arith.constant 0 : i32
    return %c0_i32, %c0_i32_0 : i32, i32
  }
  func.func @transform_4(%arg0: i32) -> (i32, i32) {
    %c0_i32 = arith.constant 0 : i32
    %c0_i32_0 = arith.constant 0 : i32
    %c0_i32_1 = arith.constant 0 : i32
    return %c0_i32, %c0_i32_0 : i32, i32
  }
  func.func @transform_5(%arg0: i32) -> (i32, i32) {
    %c0_i32 = arith.constant 0 : i32
    %c0_i32_0 = arith.constant 0 : i32
    %c0_i32_1 = arith.constant 0 : i32
    return %c0_i32, %c0_i32_0 : i32, i32
  }
  func.func @transform_6(%arg0: i32) -> (i32, i32) {
    %c0_i32 = arith.constant 0 : i32
    %c0_i32_0 = arith.constant 0 : i32
    %c0_i32_1 = arith.constant 0 : i32
    return %c0_i32, %c0_i32_0 : i32, i32
  }
  func.func @transform_7(%arg0: i32) -> (i32, i32) {
    %c0_i32 = arith.constant 0 : i32
    %c0_i32_0 = arith.constant 0 : i32
    return %arg0, %c0_i32 : i32, i32
  }
}

module attributes {stable_mosaic.version = 11 : i64} {
  func.func @_fused_mlp_kernel(%arg0: i32, %arg1: memref<8x128xf32, #tpu.memory_space<vmem>>, %arg2: memref<128x128xf32, #tpu.memory_space<vmem>>, %arg3: memref<8x128xf32, #tpu.memory_space<vmem>>, %arg4: memref<128x128xf32, #tpu.memory_space<vmem>>, %arg5: memref<8x128xf32, #tpu.memory_space<vmem>>, %arg6: memref<128x128xf32, #tpu.memory_space<vmem>>, %arg7: memref<8x128xf32, #tpu.memory_space<vmem>>, %arg8: memref<8x128xf32, #tpu.memory_space<vmem>>) attributes {dimension_semantics = [#tpu.dimension_semantics<parallel>], iteration_bounds = array<i64: 1>, scalar_prefetch = 0 : i64, scratch_operands = 0 : i64, tpu.core_type = #tpu.core_type<tc>, window_params = [{transform_indices = @transform_0, window_bounds = array<i64: 8, 128>}, {pipeline_mode = #tpu.pipeline_mode<synchronous>, transform_indices = @transform_1, window_bounds = array<i64: 128, 128>}, {pipeline_mode = #tpu.pipeline_mode<synchronous>, transform_indices = @transform_2, window_bounds = array<i64: 8, 128>}, {pipeline_mode = #tpu.pipeline_mode<synchronous>, transform_indices = @transform_3, window_bounds = array<i64: 128, 128>}, {pipeline_mode = #tpu.pipeline_mode<synchronous>, transform_indices = @transform_4, window_bounds = array<i64: 8, 128>}, {pipeline_mode = #tpu.pipeline_mode<synchronous>, transform_indices = @transform_5, window_bounds = array<i64: 128, 128>}, {pipeline_mode = #tpu.pipeline_mode<synchronous>, transform_indices = @transform_6, window_bounds = array<i64: 8, 128>}, {transform_indices = @transform_7, window_bounds = array<i64: 8, 128>}]} {
    %c0 = arith.constant 0 : index
    %c0_0 = arith.constant 0 : index
    %0 = vector.load %arg1[%c0, %c0_0] : memref<8x128xf32, #tpu.memory_space<vmem>>, vector<8x128xf32>
    %c0_1 = arith.constant 0 : index
    %c0_2 = arith.constant 0 : index
    %1 = vector.load %arg2[%c0_1, %c0_2] : memref<128x128xf32, #tpu.memory_space<vmem>>, vector<128x128xf32>
    %c0_3 = arith.constant 0 : index
    %c0_4 = arith.constant 0 : index
    %2 = vector.load %arg3[%c0_3, %c0_4] : memref<8x128xf32, #tpu.memory_space<vmem>>, vector<8x128xf32>
    %3 = vector.extract_strided_slice %2 {offsets = [0, 0], sizes = [1, 128], strides = [1, 1]} : vector<8x128xf32> to vector<1x128xf32>
    %cst = arith.constant dense<0.000000e+00> : vector<8x128xf32>
    %4 = tpu.matmul %0, %1, %cst {dimension_numbers = #tpu.dot_dimension_numbers<[1], [0], [0], [1], [0, 0, 1, 1], [], []>} : vector<8x128xf32>, vector<128x128xf32>, vector<8x128xf32> -> vector<8x128xf32>
    %5 = vector.broadcast %3 : vector<1x128xf32> to vector<8x128xf32>
    %6 = arith.addf %4, %5 : vector<8x128xf32>
    %7 = math.tanh %6 : vector<8x128xf32>
    %c0_5 = arith.constant 0 : index
    %c0_6 = arith.constant 0 : index
    %8 = vector.load %arg4[%c0_5, %c0_6] : memref<128x128xf32, #tpu.memory_space<vmem>>, vector<128x128xf32>
    %c0_7 = arith.constant 0 : index
    %c0_8 = arith.constant 0 : index
    %9 = vector.load %arg5[%c0_7, %c0_8] : memref<8x128xf32, #tpu.memory_space<vmem>>, vector<8x128xf32>
    %10 = vector.extract_strided_slice %9 {offsets = [0, 0], sizes = [1, 128], strides = [1, 1]} : vector<8x128xf32> to vector<1x128xf32>
    %cst_9 = arith.constant dense<0.000000e+00> : vector<8x128xf32>
    %11 = tpu.matmul %7, %8, %cst_9 {dimension_numbers = #tpu.dot_dimension_numbers<[1], [0], [0], [1], [0, 0, 1, 1], [], []>} : vector<8x128xf32>, vector<128x128xf32>, vector<8x128xf32> -> vector<8x128xf32>
    %12 = vector.broadcast %10 : vector<1x128xf32> to vector<8x128xf32>
    %13 = arith.addf %11, %12 : vector<8x128xf32>
    %14 = math.tanh %13 : vector<8x128xf32>
    %c0_10 = arith.constant 0 : index
    %c0_11 = arith.constant 0 : index
    %15 = vector.load %arg6[%c0_10, %c0_11] : memref<128x128xf32, #tpu.memory_space<vmem>>, vector<128x128xf32>
    %c0_12 = arith.constant 0 : index
    %c0_13 = arith.constant 0 : index
    %16 = vector.load %arg7[%c0_12, %c0_13] : memref<8x128xf32, #tpu.memory_space<vmem>>, vector<8x128xf32>
    %17 = vector.extract_strided_slice %16 {offsets = [0, 0], sizes = [1, 128], strides = [1, 1]} : vector<8x128xf32> to vector<1x128xf32>
    %cst_14 = arith.constant dense<0.000000e+00> : vector<8x128xf32>
    %18 = tpu.matmul %14, %15, %cst_14 {dimension_numbers = #tpu.dot_dimension_numbers<[1], [0], [0], [1], [0, 0, 1, 1], [], []>} : vector<8x128xf32>, vector<128x128xf32>, vector<8x128xf32> -> vector<8x128xf32>
    %19 = vector.broadcast %17 : vector<1x128xf32> to vector<8x128xf32>
    %20 = arith.addf %18, %19 : vector<8x128xf32>
    %c0_15 = arith.constant 0 : index
    %c0_16 = arith.constant 0 : index
    %21 = vector.load %arg8[%c0_15, %c0_16] : memref<8x128xf32, #tpu.memory_space<vmem>>, vector<8x128xf32>
    tpu.vector_store %arg8[%c0_15, %c0_16], %20 {strides = array<i32>} : memref<8x128xf32, #tpu.memory_space<vmem>>, vector<8x128xf32>,
    return
  }
  func.func @transform_0(%arg0: i32) -> (i32, i32) {
    %c0_i32 = arith.constant 0 : i32
    %c0_i32_0 = arith.constant 0 : i32
    return %arg0, %c0_i32 : i32, i32
  }
  func.func @transform_1(%arg0: i32) -> (i32, i32) {
    %c0_i32 = arith.constant 0 : i32
    %c0_i32_0 = arith.constant 0 : i32
    %c0_i32_1 = arith.constant 0 : i32
    return %c0_i32, %c0_i32_0 : i32, i32
  }
  func.func @transform_2(%arg0: i32) -> (i32, i32) {
    %c0_i32 = arith.constant 0 : i32
    %c0_i32_0 = arith.constant 0 : i32
    %c0_i32_1 = arith.constant 0 : i32
    return %c0_i32, %c0_i32_0 : i32, i32
  }
  func.func @transform_3(%arg0: i32) -> (i32, i32) {
    %c0_i32 = arith.constant 0 : i32
    %c0_i32_0 = arith.constant 0 : i32
    %c0_i32_1 = arith.constant 0 : i32
    return %c0_i32, %c0_i32_0 : i32, i32
  }
  func.func @transform_4(%arg0: i32) -> (i32, i32) {
    %c0_i32 = arith.constant 0 : i32
    %c0_i32_0 = arith.constant 0 : i32
    %c0_i32_1 = arith.constant 0 : i32
    return %c0_i32, %c0_i32_0 : i32, i32
  }
  func.func @transform_5(%arg0: i32) -> (i32, i32) {
    %c0_i32 = arith.constant 0 : i32
    %c0_i32_0 = arith.constant 0 : i32
    %c0_i32_1 = arith.constant 0 : i32
    return %c0_i32, %c0_i32_0 : i32, i32
  }
  func.func @transform_6(%arg0: i32) -> (i32, i32) {
    %c0_i32 = arith.constant 0 : i32
    %c0_i32_0 = arith.constant 0 : i32
    %c0_i32_1 = arith.constant 0 : i32
    return %c0_i32, %c0_i32_0 : i32, i32
  }
  func.func @transform_7(%arg0: i32) -> (i32, i32) {
    %c0_i32 = arith.constant 0 : i32
    %c0_i32_0 = arith.constant 0 : i32
    return %arg0, %c0_i32 : i32, i32
  }
}

</mosaic_0001>

<llo_original>
// kernel: tpu_custom_call.1
$region0: #{tpu_custom_call.1}
  #allocation0 [shape = 'u32[]', space=smem, size = 0x4, offset = 0x4, fixed_abs, tag = 'smem constant byte address 0x4 - core index']
  #allocation1 [shape = 'u32[144,128]{1,0:T(1,128)}', space=vmem, size = 0x12000, scoped, tag = 'internal scratch']
  %s0 = inlined_call_operand.hbm [shape: f32[8,128], index: 0, kind: input, shape index: {}]
  %s1 = inlined_call_operand.hbm [shape: f32[128,128], index: 1, kind: input, shape index: {}]
  %s2 = inlined_call_operand.hbm [shape: f32[8,128], index: 2, kind: input, shape index: {}]
  %s3 = inlined_call_operand.hbm [shape: f32[128,128], index: 3, kind: input, shape index: {}]
  %s4 = inlined_call_operand.vmem [shape: f32[8,128], index: 4, kind: input, shape index: {}]
  %s5 = inlined_call_operand.hbm [shape: f32[128,128], index: 5, kind: input, shape index: {}]
  %s6 = inlined_call_operand.vmem [shape: f32[8,128], index: 6, kind: input, shape index: {}]
  %s7 = inlined_call_operand.hbm [shape: f32[8,128], index: 7, kind: output, shape index: {}]
  %s8 = sld [smem:[#allocation0]]
  $region58: #{tpu_custom_call.1} parent=0
    _
  %s10 = ssub.s32 1, %s8
  %s11 = scalar_select 0, %s10, %s8
  $region1: #{tpu_custom_call.1} parent=0
    #allocation2 [shape = 'u8[4096]{0}', space=vmem, size = 0x1000, scoped, tag = 'input window, operand 0, single buffered']
    #allocation3 [shape = 's32[1]{0}', space=sflag, size = 0x4, scoped, tag = 'scoped memory for tpu_custom_call.1']
    #allocation4 [shape = 's32[1]{0}', space=sflag, size = 0x4, scoped, tag = 'scoped memory for tpu_custom_call.1']
    #allocation5 [shape = 'u8[65536]{0}', space=vmem, size = 0x10000, scoped, tag = 'input window, operand 1, single buffered']
    #allocation6 [shape = 's32[1]{0}', space=sflag, size = 0x4, scoped, tag = 'scoped memory for tpu_custom_call.1']
    #allocation7 [shape = 'u8[4096]{0}', space=vmem, size = 0x1000, scoped, tag = 'input window, operand 2, single buffered']
    #allocation8 [shape = 'u8[65536]{0}', space=vmem, size = 0x10000, scoped, tag = 'input window, operand 3, single buffered']
    #allocation9 [shape = 's32[1]{0}', space=sflag, size = 0x4, scoped, tag = 'scoped memory for tpu_custom_call.1']
    #allocation10 [shape = 'u8[65536]{0}', space=vmem, size = 0x10000, scoped, tag = 'input window, operand 5, single buffered']
    #allocation11 [shape = 'u8[4096]{0}', space=vmem, size = 0x1000, scoped, tag = 'output window, operand 0, single buffered']
    %12 = vsyncpa [#allocation3], 0
    %13 = vsyncpa [#allocation6], 0
    %14 = vsyncpa [#allocation9], 0
    %15 = vsyncpa [#allocation4], 0
    // Predicated region
    $region2: #{tpu_custom_call.1} parent=1 // pred_check
      _
    $region3: #{tpu_custom_call.1} parent=1 // pred_check_branch
      %17 = sbr.rel (0) target = $region5
    $region4: #{tpu_custom_call.1} parent=1 // pred_region
      %s19 = ssub.s32 128, 128
      %20 = vsyncadd [#allocation3], %s19
      %s22 = sshll.u32 [#allocation2], 4
      %s23 = int_to_ptr.vmem [resolvable:$true] %s22
      %25 = dma.hbm_to_vmem [thread:$0]  %s0, 128, %s23, [#allocation3]
    $region5: #{tpu_custom_call.1} parent=1 // pred_fallthru
      _
    // Predicated region
    $region6: #{tpu_custom_call.1} parent=1 // pred_check
      _
    $region7: #{tpu_custom_call.1} parent=1 // pred_check_branch
      %27 = sbr.rel (0) target = $region9
    $region8: #{tpu_custom_call.1} parent=1 // pred_region
      %s29 = ssub.s32 2048, 2048
      %30 = vsyncadd [#allocation6], %s29
      %s31 = sshll.u32 [#allocation5], 4
      %s32 = int_to_ptr.vmem [resolvable:$true] %s31
      %37 = dma.hbm_to_vmem [thread:$0]  %s1, 2048, %s32, [#allocation6], 128, 128, 8
    $region9: #{tpu_custom_call.1} parent=1 // pred_fallthru
      _
    // Predicated region
    $region10: #{tpu_custom_call.1} parent=1 // pred_check
      _
    $region11: #{tpu_custom_call.1} parent=1 // pred_check_branch
      %39 = sbr.rel (0) target = $region13
    $region12: #{tpu_custom_call.1} parent=1 // pred_region
      %s41 = ssub.s32 128, 128
      %42 = vsyncadd [#allocation6], %s41
      %s44 = sshll.u32 [#allocation7], 4
      %s45 = int_to_ptr.vmem [resolvable:$true] %s44
      %47 = dma.hbm_to_vmem [thread:$0]  %s2, 128, %s45, [#allocation6]
    $region13: #{tpu_custom_call.1} parent=1 // pred_fallthru
      _
    // Predicated region
    $region14: #{tpu_custom_call.1} parent=1 // pred_check
      _
    $region15: #{tpu_custom_call.1} parent=1 // pred_check_branch
      %49 = sbr.rel (0) target = $region17
    $region16: #{tpu_custom_call.1} parent=1 // pred_region
      %s51 = ssub.s32 2048, 2048
      %52 = vsyncadd [#allocation9], %s51
      %s53 = sshll.u32 [#allocation8], 4
      %s54 = int_to_ptr.vmem [resolvable:$true] %s53
      %59 = dma.hbm_to_vmem [thread:$0]  %s3, 2048, %s54, [#allocation9], 128, 128, 8
    $region17: #{tpu_custom_call.1} parent=1 // pred_fallthru
      _
    // Predicated region
    $region18: #{tpu_custom_call.1} parent=1 // pred_check
      _
    $region19: #{tpu_custom_call.1} parent=1 // pred_check_branch
      %61 = sbr.rel (0) target = $region21
    $region20: #{tpu_custom_call.1} parent=1 // pred_region
      _
    $region21: #{tpu_custom_call.1} parent=1 // pred_fallthru
      _
    // Predicated region
    $region22: #{tpu_custom_call.1} parent=1 // pred_check
      _
    $region23: #{tpu_custom_call.1} parent=1 // pred_check_branch
      %63 = sbr.rel (0) target = $region25
    $region24: #{tpu_custom_call.1} parent=1 // pred_region
      %s65 = ssub.s32 2048, 2048
      %66 = vsyncadd [#allocation9], %s65
      %s67 = sshll.u32 [#allocation10], 4
      %s68 = int_to_ptr.vmem [resolvable:$true] %s67
      %73 = dma.hbm_to_vmem [thread:$0]  %s5, 2048, %s68, [#allocation9], 128, 128, 8
    $region25: #{tpu_custom_call.1} parent=1 // pred_fallthru
      _
    // Predicated region
    $region26: #{tpu_custom_call.1} parent=1 // pred_check
      _
    $region27: #{tpu_custom_call.1} parent=1 // pred_check_branch
      %75 = sbr.rel (0) target = $region29
    $region28: #{tpu_custom_call.1} parent=1 // pred_region
      _
    $region29: #{tpu_custom_call.1} parent=1 // pred_fallthru
      _
    // Predicated region
    $region30: #{tpu_custom_call.1} parent=1 // pred_check
      _
    $region31: #{tpu_custom_call.1} parent=1 // pred_check_branch
      %77 = sbr.rel (0) target = $region33
    $region32: #{tpu_custom_call.1} parent=1 // pred_region
      %78 = dma.done [#allocation3], 128
    $region33: #{tpu_custom_call.1} parent=1 // pred_fallthru
      _
    // Predicated region
    $region34: #{tpu_custom_call.1} parent=1 // pred_check
      _
    $region35: #{tpu_custom_call.1} parent=1 // pred_check_branch
      %80 = sbr.rel (0) target = $region37
    $region36: #{tpu_custom_call.1} parent=1 // pred_region
      %81 = dma.done [#allocation6], 2048
    $region37: #{tpu_custom_call.1} parent=1 // pred_fallthru
      _
    // Predicated region
    $region38: #{tpu_custom_call.1} parent=1 // pred_check
      _
    $region39: #{tpu_custom_call.1} parent=1 // pred_check_branch
      %83 = sbr.rel (0) target = $region41
    $region40: #{tpu_custom_call.1} parent=1 // pred_region
      %84 = dma.done [#allocation6], 128
    $region41: #{tpu_custom_call.1} parent=1 // pred_fallthru
      _
    // Predicated region
    $region42: #{tpu_custom_call.1} parent=1 // pred_check
      _
    $region43: #{tpu_custom_call.1} parent=1 // pred_check_branch
      %86 = sbr.rel (0) target = $region45
    $region44: #{tpu_custom_call.1} parent=1 // pred_region
      %87 = dma.done [#allocation9], 2048
    $region45: #{tpu_custom_call.1} parent=1 // pred_fallthru
      _
    // Predicated region
    $region46: #{tpu_custom_call.1} parent=1 // pred_check
      _
    $region47: #{tpu_custom_call.1} parent=1 // pred_check_branch
      %89 = sbr.rel (0) target = $region49
    $region48: #{tpu_custom_call.1} parent=1 // pred_region
      %90 = dma.done [#allocation9], 2048
    $region49: #{tpu_custom_call.1} parent=1 // pred_fallthru
      _
    %v91 = vld [vmem:[#allocation2] sm:$0xff]
    %v92 = vld [vmem:[#allocation5] sm:$0xff]
    %v93 = vld [vmem:[#allocation5 + $0x8] sm:$0xff]
    %v94 = vld [vmem:[#allocation5 + $0x10] sm:$0xff]
    %v95 = vld [vmem:[#allocation5 + $0x18] sm:$0xff]
    %v96 = vld [vmem:[#allocation5 + $0x20] sm:$0xff]
    %v97 = vld [vmem:[#allocation5 + $0x28] sm:$0xff]
    %v98 = vld [vmem:[#allocation5 + $0x30] sm:$0xff]
    %v99 = vld [vmem:[#allocation5 + $0x38] sm:$0xff]
    %v100 = vld [vmem:[#allocation5 + $0x40] sm:$0xff]
    %v101 = vld [vmem:[#allocation5 + $0x48] sm:$0xff]
    %v102 = vld [vmem:[#allocation5 + $0x50] sm:$0xff]
    %v103 = vld [vmem:[#allocation5 + $0x58] sm:$0xff]
    %v104 = vld [vmem:[#allocation5 + $0x60] sm:$0xff]
    %v105 = vld [vmem:[#allocation5 + $0x68] sm:$0xff]
    %v106 = vld [vmem:[#allocation5 + $0x70] sm:$0xff]
    %v107 = vld [vmem:[#allocation5 + $0x78] sm:$0xff]
    %v108 = vld [vmem:[#allocation7] sm:$0xff]
    %v109 = vlaneseq
    %v110 = vshrl.u32 %v109, 7
    %v111 = vsub.s32 0, %v110
    %v112 = vrot.slane %v108, %v111
    %113 = vmatprep.subr.mxu0 0.0
    %114 = vmatpush1.msra.mxu0 %v92
    %115 = vmatprep.subr.mxu0 0.0
    %116 = vmatpush1.msra.mxu0 %v93
    %117 = vmatprep.subr.mxu0 0.0
    %118 = vmatpush1.msra.mxu0 %v94
    %119 = vmatprep.subr.mxu0 0.0
    %120 = vmatpush1.msra.mxu0 %v95
    %121 = vmatprep.subr.mxu0 0.0
    %122 = vmatpush1.msra.mxu0 %v96
    %123 = vmatprep.subr.mxu0 0.0
    %124 = vmatpush1.msra.mxu0 %v97
    %125 = vmatprep.subr.mxu0 0.0
    %126 = vmatpush1.msra.mxu0 %v98
    %127 = vmatprep.subr.mxu0 0.0
    %128 = vmatpush1.msra.mxu0 %v99
    %129 = vmatprep.subr.mxu0 0.0
    %130 = vmatpush1.msra.mxu0 %v100
    %131 = vmatprep.subr.mxu0 0.0
    %132 = vmatpush1.msra.mxu0 %v101
    %133 = vmatprep.subr.mxu0 0.0
    %134 = vmatpush1.msra.mxu0 %v102
    %135 = vmatprep.subr.mxu0 0.0
    %136 = vmatpush1.msra.mxu0 %v103
    %137 = vmatprep.subr.mxu0 0.0
    %138 = vmatpush1.msra.mxu0 %v104
    %139 = vmatprep.subr.mxu0 0.0
    %140 = vmatpush1.msra.mxu0 %v105
    %141 = vmatprep.subr.mxu0 0.0
    %142 = vmatpush1.msra.mxu0 %v106
    %143 = vmatprep.subr.mxu0 0.0
    %144 = vmatpush1.msra.mxu0 %v107
    %145 = vmatprep.subr.mxu0 0.0
    %146 = vmatpush1.msra.mxu0 0.0
    %147 = vmatprep.subr.mxu0 0.0
    %148 = vmatpush1.msra.mxu0 0.0
    %149 = vmatprep.subr.mxu0 0.0
    %150 = vmatpush1.msra.mxu0 0.0
    %151 = vmatprep.subr.mxu0 0.0
    %152 = vmatpush1.msra.mxu0 0.0
    %153 = vmatprep.subr.mxu0 0.0
    %154 = vmatpush1.msra.mxu0 0.0
    %155 = vmatprep.subr.mxu0 0.0
    %156 = vmatpush1.msra.mxu0 0.0
    %157 = vmatprep.subr.mxu0 0.0
    %158 = vmatpush1.msra.mxu0 0.0
    %159 = vmatprep.subr.mxu0 0.0
    %160 = vmatpush1.msra.mxu0 0.0
    %161 = vmatprep.subr.mxu0 0.0
    %162 = vmatpush1.msra.mxu0 0.0
    %163 = vmatprep.subr.mxu0 0.0
    %164 = vmatpush1.msra.mxu0 0.0
    %165 = vmatprep.subr.mxu0 0.0
    %166 = vmatpush1.msra.mxu0 0.0
    %167 = vmatprep.subr.mxu0 0.0
    %168 = vmatpush1.msra.mxu0 0.0
    %169 = vmatprep.subr.mxu0 0.0
    %170 = vmatpush1.msra.mxu0 0.0
    %171 = vmatprep.subr.mxu0 0.0
    %172 = vmatpush1.msra.mxu0 0.0
    %173 = vmatprep.subr.mxu0 0.0
    %174 = vmatpush1.msra.mxu0 0.0
    %175 = vmatprep.subr.mxu0 0.0
    %176 = vmatpush1.msra.mxu0 0.0
    %177 = vmatprep.mubr.f32.mxu0 0.0
    %178 = vmatmul.mubr.f32.gmra.mrb[0].mxu0 %v91
    %v179 = vpop.f32.mrb[0].mxu0
    %v180 = vadd.f32 %v112, %v179
    %v181 = vpop.f32.mrb[0].mxu0
    %182 = vdwg.mxu0
    %v183 = vtanh.pop %v180
    %v184 = vld [vmem:[#allocation8] sm:$0xff]
    %v185 = vld [vmem:[#allocation8 + $0x8] sm:$0xff]
    %v186 = vld [vmem:[#allocation8 + $0x10] sm:$0xff]
    %v187 = vld [vmem:[#allocation8 + $0x18] sm:$0xff]
    %v188 = vld [vmem:[#allocation8 + $0x20] sm:$0xff]
    %v189 = vld [vmem:[#allocation8 + $0x28] sm:$0xff]
    %v190 = vld [vmem:[#allocation8 + $0x30] sm:$0xff]
    %v191 = vld [vmem:[#allocation8 + $0x38] sm:$0xff]
    %v192 = vld [vmem:[#allocation8 + $0x40] sm:$0xff]
    %v193 = vld [vmem:[#allocation8 + $0x48] sm:$0xff]
    %v194 = vld [vmem:[#allocation8 + $0x50] sm:$0xff]
    %v195 = vld [vmem:[#allocation8 + $0x58] sm:$0xff]
    %v196 = vld [vmem:[#allocation8 + $0x60] sm:$0xff]
    %v197 = vld [vmem:[#allocation8 + $0x68] sm:$0xff]
    %v198 = vld [vmem:[#allocation8 + $0x70] sm:$0xff]
    %v199 = vld [vmem:[#allocation8 + $0x78] sm:$0xff]
    %v200 = vld [vmem:[%s4] sm:$0xff]
    %v201 = vlaneseq
    %v202 = vshrl.u32 %v201, 7
    %v203 = vsub.s32 0, %v202
    %v204 = vrot.slane %v200, %v203
    %205 = vmatprep.subr.mxu0 0.0
    %206 = vmatpush1.msra.mxu0 %v184
    %207 = vmatprep.subr.mxu0 0.0
    %208 = vmatpush1.msra.mxu0 %v185
    %209 = vmatprep.subr.mxu0 0.0
    %210 = vmatpush1.msra.mxu0 %v186
    %211 = vmatprep.subr.mxu0 0.0
    %212 = vmatpush1.msra.mxu0 %v187
    %213 = vmatprep.subr.mxu0 0.0
    %214 = vmatpush1.msra.mxu0 %v188
    %215 = vmatprep.subr.mxu0 0.0
    %216 = vmatpush1.msra.mxu0 %v189
    %217 = vmatprep.subr.mxu0 0.0
    %218 = vmatpush1.msra.mxu0 %v190
    %219 = vmatprep.subr.mxu0 0.0
    %220 = vmatpush1.msra.mxu0 %v191
    %221 = vmatprep.subr.mxu0 0.0
    %222 = vmatpush1.msra.mxu0 %v192
    %223 = vmatprep.subr.mxu0 0.0
    %224 = vmatpush1.msra.mxu0 %v193
    %225 = vmatprep.subr.mxu0 0.0
    %226 = vmatpush1.msra.mxu0 %v194
    %227 = vmatprep.subr.mxu0 0.0
    %228 = vmatpush1.msra.mxu0 %v195
    %229 = vmatprep.subr.mxu0 0.0
    %230 = vmatpush1.msra.mxu0 %v196
    %231 = vmatprep.subr.mxu0 0.0
    %232 = vmatpush1.msra.mxu0 %v197
    %233 = vmatprep.subr.mxu0 0.0
    %234 = vmatpush1.msra.mxu0 %v198
    %235 = vmatprep.subr.mxu0 0.0
    %236 = vmatpush1.msra.mxu0 %v199
    %237 = vmatprep.subr.mxu0 0.0
    %238 = vmatpush1.msra.mxu0 0.0
    %239 = vmatprep.subr.mxu0 0.0
    %240 = vmatpush1.msra.mxu0 0.0
    %241 = vmatprep.subr.mxu0 0.0
    %242 = vmatpush1.msra.mxu0 0.0
    %243 = vmatprep.subr.mxu0 0.0
    %244 = vmatpush1.msra.mxu0 0.0
    %245 = vmatprep.subr.mxu0 0.0
    %246 = vmatpush1.msra.mxu0 0.0
    %247 = vmatprep.subr.mxu0 0.0
    %248 = vmatpush1.msra.mxu0 0.0
    %249 = vmatprep.subr.mxu0 0.0
    %250 = vmatpush1.msra.mxu0 0.0
    %251 = vmatprep.subr.mxu0 0.0
    %252 = vmatpush1.msra.mxu0 0.0
    %253 = vmatprep.subr.mxu0 0.0
    %254 = vmatpush1.msra.mxu0 0.0
    %255 = vmatprep.subr.mxu0 0.0
    %256 = vmatpush1.msra.mxu0 0.0
    %257 = vmatprep.subr.mxu0 0.0
    %258 = vmatpush1.msra.mxu0 0.0
    %259 = vmatprep.subr.mxu0 0.0
    %260 = vmatpush1.msra.mxu0 0.0
    %261 = vmatprep.subr.mxu0 0.0
    %262 = vmatpush1.msra.mxu0 0.0
    %263 = vmatprep.subr.mxu0 0.0
    %264 = vmatpush1.msra.mxu0 0.0
    %265 = vmatprep.subr.mxu0 0.0
    %266 = vmatpush1.msra.mxu0 0.0
    %267 = vmatprep.subr.mxu0 0.0
    %268 = vmatpush1.msra.mxu0 0.0
    %269 = vmatprep.mubr.f32.mxu0 0.0
    %270 = vmatmul.mubr.f32.gmra.mrb[0].mxu0 %v183
    %v271 = vpop.f32.mrb[0].mxu0
    %v272 = vadd.f32 %v204, %v271
    %v273 = vpop.f32.mrb[0].mxu0
    %274 = vdwg.mxu0
    %v275 = vtanh.pop %v272
    %v276 = vld [vmem:[#allocation10] sm:$0xff]
    %v277 = vld [vmem:[#allocation10 + $0x8] sm:$0xff]
    %v278 = vld [vmem:[#allocation10 + $0x10] sm:$0xff]
    %v279 = vld [vmem:[#allocation10 + $0x18] sm:$0xff]
    %v280 = vld [vmem:[#allocation10 + $0x20] sm:$0xff]
    %v281 = vld [vmem:[#allocation10 + $0x28] sm:$0xff]
    %v282 = vld [vmem:[#allocation10 + $0x30] sm:$0xff]
    %v283 = vld [vmem:[#allocation10 + $0x38] sm:$0xff]
    %v284 = vld [vmem:[#allocation10 + $0x40] sm:$0xff]
    %v285 = vld [vmem:[#allocation10 + $0x48] sm:$0xff]
    %v286 = vld [vmem:[#allocation10 + $0x50] sm:$0xff]
    %v287 = vld [vmem:[#allocation10 + $0x58] sm:$0xff]
    %v288 = vld [vmem:[#allocation10 + $0x60] sm:$0xff]
    %v289 = vld [vmem:[#allocation10 + $0x68] sm:$0xff]
    %v290 = vld [vmem:[#allocation10 + $0x70] sm:$0xff]
    %v291 = vld [vmem:[#allocation10 + $0x78] sm:$0xff]
    %v292 = vld [vmem:[%s6] sm:$0xff]
    %v293 = vlaneseq
    %v294 = vshrl.u32 %v293, 7
    %v295 = vsub.s32 0, %v294
    %v296 = vrot.slane %v292, %v295
    %297 = vmatprep.subr.mxu0 0.0
    %298 = vmatpush1.msra.mxu0 %v276
    %299 = vmatprep.subr.mxu0 0.0
    %300 = vmatpush1.msra.mxu0 %v277
    %301 = vmatprep.subr.mxu0 0.0
    %302 = vmatpush1.msra.mxu0 %v278
    %303 = vmatprep.subr.mxu0 0.0
    %304 = vmatpush1.msra.mxu0 %v279
    %305 = vmatprep.subr.mxu0 0.0
    %306 = vmatpush1.msra.mxu0 %v280
    %307 = vmatprep.subr.mxu0 0.0
    %308 = vmatpush1.msra.mxu0 %v281
    %309 = vmatprep.subr.mxu0 0.0
    %310 = vmatpush1.msra.mxu0 %v282
    %311 = vmatprep.subr.mxu0 0.0
    %312 = vmatpush1.msra.mxu0 %v283
    %313 = vmatprep.subr.mxu0 0.0
    %314 = vmatpush1.msra.mxu0 %v284
    %315 = vmatprep.subr.mxu0 0.0
    %316 = vmatpush1.msra.mxu0 %v285
    %317 = vmatprep.subr.mxu0 0.0
    %318 = vmatpush1.msra.mxu0 %v286
    %319 = vmatprep.subr.mxu0 0.0
    %320 = vmatpush1.msra.mxu0 %v287
    %321 = vmatprep.subr.mxu0 0.0
    %322 = vmatpush1.msra.mxu0 %v288
    %323 = vmatprep.subr.mxu0 0.0
    %324 = vmatpush1.msra.mxu0 %v289
    %325 = vmatprep.subr.mxu0 0.0
    %326 = vmatpush1.msra.mxu0 %v290
    %327 = vmatprep.subr.mxu0 0.0
    %328 = vmatpush1.msra.mxu0 %v291
    %329 = vmatprep.subr.mxu0 0.0
    %330 = vmatpush1.msra.mxu0 0.0
    %331 = vmatprep.subr.mxu0 0.0
    %332 = vmatpush1.msra.mxu0 0.0
    %333 = vmatprep.subr.mxu0 0.0
    %334 = vmatpush1.msra.mxu0 0.0
    %335 = vmatprep.subr.mxu0 0.0
    %336 = vmatpush1.msra.mxu0 0.0
    %337 = vmatprep.subr.mxu0 0.0
    %338 = vmatpush1.msra.mxu0 0.0
    %339 = vmatprep.subr.mxu0 0.0
    %340 = vmatpush1.msra.mxu0 0.0
    %341 = vmatprep.subr.mxu0 0.0
    %342 = vmatpush1.msra.mxu0 0.0
    %343 = vmatprep.subr.mxu0 0.0
    %344 = vmatpush1.msra.mxu0 0.0
    %345 = vmatprep.subr.mxu0 0.0
    %346 = vmatpush1.msra.mxu0 0.0
    %347 = vmatprep.subr.mxu0 0.0
    %348 = vmatpush1.msra.mxu0 0.0
    %349 = vmatprep.subr.mxu0 0.0
    %350 = vmatpush1.msra.mxu0 0.0
    %351 = vmatprep.subr.mxu0 0.0
    %352 = vmatpush1.msra.mxu0 0.0
    %353 = vmatprep.subr.mxu0 0.0
    %354 = vmatpush1.msra.mxu0 0.0
    %355 = vmatprep.subr.mxu0 0.0
    %356 = vmatpush1.msra.mxu0 0.0
    %357 = vmatprep.subr.mxu0 0.0
    %358 = vmatpush1.msra.mxu0 0.0
    %359 = vmatprep.subr.mxu0 0.0
    %360 = vmatpush1.msra.mxu0 0.0
    %361 = vmatprep.mubr.f32.mxu0 0.0
    %362 = vmatmul.mubr.f32.gmra.mrb[0].mxu0 %v275
    %v363 = vpop.f32.mrb[0].mxu0
    %v364 = vadd.f32 %v296, %v363
    %v365 = vpop.f32.mrb[0].mxu0
    %366 = vdwg.mxu0
    %367 = vst [vmem:[#allocation11] sm:$0xff] %v364
    // Predicated region
    $region50: #{tpu_custom_call.1} parent=1 // pred_check
      _
    $region51: #{tpu_custom_call.1} parent=1 // pred_check_branch
      %369 = sbr.rel (0) target = $region53
    $region52: #{tpu_custom_call.1} parent=1 // pred_region
      %s371 = ssub.s32 128, 128
      %372 = vsyncadd [#allocation4], %s371
      %s374 = sshll.u32 [#allocation11], 4
      %s375 = int_to_ptr.vmem [resolvable:$true] %s374
      %377 = dma.vmem_to_hbm [thread:$0]  %s375, 128, %s7, [#allocation4]
    $region53: #{tpu_custom_call.1} parent=1 // pred_fallthru
      _
    // Predicated region
    $region54: #{tpu_custom_call.1} parent=1 // pred_check
      _
    $region55: #{tpu_custom_call.1} parent=1 // pred_check_branch
      %379 = sbr.rel (0) target = $region57
    $region56: #{tpu_custom_call.1} parent=1 // pred_region
      %380 = dma.done [#allocation4], 128
    $region57: #{tpu_custom_call.1} parent=1 // pred_fallthru
      _
    %381 = vsyncpa [#allocation3], 1
    %382 = vsyncpa [#allocation6], 1
    %383 = vsyncpa [#allocation9], 1
    %384 = vsyncpa [#allocation4], 1

// kernel: tpu_custom_call.1
$region0: #{tpu_custom_call.1}
  #allocation0 [shape = 'u32[]', space=smem, size = 0x4, offset = 0x4, fixed_abs, tag = 'smem constant byte address 0x4 - core index']
  #allocation1 [shape = 'u32[144,128]{1,0:T(1,128)}', space=vmem, size = 0x12000, scoped, tag = 'internal scratch']
  %s0 = inlined_call_operand.hbm [shape: f32[8,128], index: 0, kind: input, shape index: {}]
  %s1 = inlined_call_operand.hbm [shape: f32[128,128], index: 1, kind: input, shape index: {}]
  %s2 = inlined_call_operand.hbm [shape: f32[8,128], index: 2, kind: input, shape index: {}]
  %s3 = inlined_call_operand.hbm [shape: f32[128,128], index: 3, kind: input, shape index: {}]
  %s4 = inlined_call_operand.vmem [shape: f32[8,128], index: 4, kind: input, shape index: {}]
  %s5 = inlined_call_operand.hbm [shape: f32[128,128], index: 5, kind: input, shape index: {}]
  %s6 = inlined_call_operand.vmem [shape: f32[8,128], index: 6, kind: input, shape index: {}]
  %s7 = inlined_call_operand.hbm [shape: f32[8,128], index: 7, kind: output, shape index: {}]
  %s8 = sld [smem:[#allocation0]]
  $region58: #{tpu_custom_call.1} parent=0
    _
  %s10 = ssub.s32 1, %s8
  %s11 = scalar_select 0, %s10, %s8
  $region1: #{tpu_custom_call.1} parent=0
    #allocation2 [shape = 'u8[4096]{0}', space=vmem, size = 0x1000, scoped, tag = 'input window, operand 0, single buffered']
    #allocation3 [shape = 's32[1]{0}', space=sflag, size = 0x4, scoped, tag = 'scoped memory for tpu_custom_call.1']
    #allocation4 [shape = 's32[1]{0}', space=sflag, size = 0x4, scoped, tag = 'scoped memory for tpu_custom_call.1']
    #allocation5 [shape = 'u8[65536]{0}', space=vmem, size = 0x10000, scoped, tag = 'input window, operand 1, single buffered']
    #allocation6 [shape = 's32[1]{0}', space=sflag, size = 0x4, scoped, tag = 'scoped memory for tpu_custom_call.1']
    #allocation7 [shape = 'u8[4096]{0}', space=vmem, size = 0x1000, scoped, tag = 'input window, operand 2, single buffered']
    #allocation8 [shape = 'u8[65536]{0}', space=vmem, size = 0x10000, scoped, tag = 'input window, operand 3, single buffered']
    #allocation9 [shape = 's32[1]{0}', space=sflag, size = 0x4, scoped, tag = 'scoped memory for tpu_custom_call.1']
    #allocation10 [shape = 'u8[65536]{0}', space=vmem, size = 0x10000, scoped, tag = 'input window, operand 5, single buffered']
    #allocation11 [shape = 'u8[4096]{0}', space=vmem, size = 0x1000, scoped, tag = 'output window, operand 0, single buffered']
    %12 = vsyncpa [#allocation3], 0
    %13 = vsyncpa [#allocation6], 0
    %14 = vsyncpa [#allocation9], 0
    %15 = vsyncpa [#allocation4], 0
    // Predicated region
    $region2: #{tpu_custom_call.1} parent=1 // pred_check
      _
    $region3: #{tpu_custom_call.1} parent=1 // pred_check_branch
      %17 = sbr.rel (0) target = $region5
    $region4: #{tpu_custom_call.1} parent=1 // pred_region
      %s19 = ssub.s32 128, 128
      %20 = vsyncadd [#allocation3], %s19
      %s22 = sshll.u32 [#allocation2], 4
      %s23 = int_to_ptr.vmem [resolvable:$true] %s22
      %25 = dma.hbm_to_vmem [thread:$0]  %s0, 128, %s23, [#allocation3]
    $region5: #{tpu_custom_call.1} parent=1 // pred_fallthru
      _
    // Predicated region
    $region6: #{tpu_custom_call.1} parent=1 // pred_check
      _
    $region7: #{tpu_custom_call.1} parent=1 // pred_check_branch
      %27 = sbr.rel (0) target = $region9
    $region8: #{tpu_custom_call.1} parent=1 // pred_region
      %s29 = ssub.s32 2048, 2048
      %30 = vsyncadd [#allocation6], %s29
      %s31 = sshll.u32 [#allocation5], 4
      %s32 = int_to_ptr.vmem [resolvable:$true] %s31
      %37 = dma.hbm_to_vmem [thread:$0]  %s1, 2048, %s32, [#allocation6], 128, 128, 8
    $region9: #{tpu_custom_call.1} parent=1 // pred_fallthru
      _
    // Predicated region
    $region10: #{tpu_custom_call.1} parent=1 // pred_check
      _
    $region11: #{tpu_custom_call.1} parent=1 // pred_check_branch
      %39 = sbr.rel (0) target = $region13
    $region12: #{tpu_custom_call.1} parent=1 // pred_region
      %s41 = ssub.s32 128, 128
      %42 = vsyncadd [#allocation6], %s41
      %s44 = sshll.u32 [#allocation7], 4
      %s45 = int_to_ptr.vmem [resolvable:$true] %s44
      %47 = dma.hbm_to_vmem [thread:$0]  %s2, 128, %s45, [#allocation6]
    $region13: #{tpu_custom_call.1} parent=1 // pred_fallthru
      _
    // Predicated region
    $region14: #{tpu_custom_call.1} parent=1 // pred_check
      _
    $region15: #{tpu_custom_call.1} parent=1 // pred_check_branch
      %49 = sbr.rel (0) target = $region17
    $region16: #{tpu_custom_call.1} parent=1 // pred_region
      %s51 = ssub.s32 2048, 2048
      %52 = vsyncadd [#allocation9], %s51
      %s53 = sshll.u32 [#allocation8], 4
      %s54 = int_to_ptr.vmem [resolvable:$true] %s53
      %59 = dma.hbm_to_vmem [thread:$0]  %s3, 2048, %s54, [#allocation9], 128, 128, 8
    $region17: #{tpu_custom_call.1} parent=1 // pred_fallthru
      _
    // Predicated region
    $region18: #{tpu_custom_call.1} parent=1 // pred_check
      _
    $region19: #{tpu_custom_call.1} parent=1 // pred_check_branch
      %61 = sbr.rel (0) target = $region21
    $region20: #{tpu_custom_call.1} parent=1 // pred_region
      _
    $region21: #{tpu_custom_call.1} parent=1 // pred_fallthru
      _
    // Predicated region
    $region22: #{tpu_custom_call.1} parent=1 // pred_check
      _
    $region23: #{tpu_custom_call.1} parent=1 // pred_check_branch
      %63 = sbr.rel (0) target = $region25
    $region24: #{tpu_custom_call.1} parent=1 // pred_region
      %s65 = ssub.s32 2048, 2048
      %66 = vsyncadd [#allocation9], %s65
      %s67 = sshll.u32 [#allocation10], 4
      %s68 = int_to_ptr.vmem [resolvable:$true] %s67
      %73 = dma.hbm_to_vmem [thread:$0]  %s5, 2048, %s68, [#allocation9], 128, 128, 8
    $region25: #{tpu_custom_call.1} parent=1 // pred_fallthru
      _
    // Predicated region
    $region26: #{tpu_custom_call.1} parent=1 // pred_check
      _
    $region27: #{tpu_custom_call.1} parent=1 // pred_check_branch
      %75 = sbr.rel (0) target = $region29
    $region28: #{tpu_custom_call.1} parent=1 // pred_region
      _
    $region29: #{tpu_custom_call.1} parent=1 // pred_fallthru
      _
    // Predicated region
    $region30: #{tpu_custom_call.1} parent=1 // pred_check
      _
    $region31: #{tpu_custom_call.1} parent=1 // pred_check_branch
      %77 = sbr.rel (0) target = $region33
    $region32: #{tpu_custom_call.1} parent=1 // pred_region
      %78 = dma.done [#allocation3], 128
    $region33: #{tpu_custom_call.1} parent=1 // pred_fallthru
      _
    // Predicated region
    $region34: #{tpu_custom_call.1} parent=1 // pred_check
      _
    $region35: #{tpu_custom_call.1} parent=1 // pred_check_branch
      %80 = sbr.rel (0) target = $region37
    $region36: #{tpu_custom_call.1} parent=1 // pred_region
      %81 = dma.done [#allocation6], 2048
    $region37: #{tpu_custom_call.1} parent=1 // pred_fallthru
      _
    // Predicated region
    $region38: #{tpu_custom_call.1} parent=1 // pred_check
      _
    $region39: #{tpu_custom_call.1} parent=1 // pred_check_branch
      %83 = sbr.rel (0) target = $region41
    $region40: #{tpu_custom_call.1} parent=1 // pred_region
      %84 = dma.done [#allocation6], 128
    $region41: #{tpu_custom_call.1} parent=1 // pred_fallthru
      _
    // Predicated region
    $region42: #{tpu_custom_call.1} parent=1 // pred_check
      _
    $region43: #{tpu_custom_call.1} parent=1 // pred_check_branch
      %86 = sbr.rel (0) target = $region45
    $region44: #{tpu_custom_call.1} parent=1 // pred_region
      %87 = dma.done [#allocation9], 2048
    $region45: #{tpu_custom_call.1} parent=1 // pred_fallthru
      _
    // Predicated region
    $region46: #{tpu_custom_call.1} parent=1 // pred_check
      _
    $region47: #{tpu_custom_call.1} parent=1 // pred_check_branch
      %89 = sbr.rel (0) target = $region49
    $region48: #{tpu_custom_call.1} parent=1 // pred_region
      %90 = dma.done [#allocation9], 2048
    $region49: #{tpu_custom_call.1} parent=1 // pred_fallthru
      _
    %v91 = vld [vmem:[#allocation2] sm:$0xff]
    %v92 = vld [vmem:[#allocation5] sm:$0xff]
    %v93 = vld [vmem:[#allocation5 + $0x8] sm:$0xff]
    %v94 = vld [vmem:[#allocation5 + $0x10] sm:$0xff]
    %v95 = vld [vmem:[#allocation5 + $0x18] sm:$0xff]
    %v96 = vld [vmem:[#allocation5 + $0x20] sm:$0xff]
    %v97 = vld [vmem:[#allocation5 + $0x28] sm:$0xff]
    %v98 = vld [vmem:[#allocation5 + $0x30] sm:$0xff]
    %v99 = vld [vmem:[#allocation5 + $0x38] sm:$0xff]
    %v100 = vld [vmem:[#allocation5 + $0x40] sm:$0xff]
    %v101 = vld [vmem:[#allocation5 + $0x48] sm:$0xff]
    %v102 = vld [vmem:[#allocation5 + $0x50] sm:$0xff]
    %v103 = vld [vmem:[#allocation5 + $0x58] sm:$0xff]
    %v104 = vld [vmem:[#allocation5 + $0x60] sm:$0xff]
    %v105 = vld [vmem:[#allocation5 + $0x68] sm:$0xff]
    %v106 = vld [vmem:[#allocation5 + $0x70] sm:$0xff]
    %v107 = vld [vmem:[#allocation5 + $0x78] sm:$0xff]
    %v108 = vld [vmem:[#allocation7] sm:$0xff]
    %v109 = vlaneseq
    %v110 = vshrl.u32 %v109, 7
    %v111 = vsub.s32 0, %v110
    %v112 = vrot.slane %v108, %v111
    %113 = vmatprep.subr.mxu0 0.0
    %114 = vmatpush1.msra.mxu0 %v92
    %115 = vmatprep.subr.mxu0 0.0
    %116 = vmatpush1.msra.mxu0 %v93
    %117 = vmatprep.subr.mxu0 0.0
    %118 = vmatpush1.msra.mxu0 %v94
    %119 = vmatprep.subr.mxu0 0.0
    %120 = vmatpush1.msra.mxu0 %v95
    %121 = vmatprep.subr.mxu0 0.0
    %122 = vmatpush1.msra.mxu0 %v96
    %123 = vmatprep.subr.mxu0 0.0
    %124 = vmatpush1.msra.mxu0 %v97
    %125 = vmatprep.subr.mxu0 0.0
    %126 = vmatpush1.msra.mxu0 %v98
    %127 = vmatprep.subr.mxu0 0.0
    %128 = vmatpush1.msra.mxu0 %v99
    %129 = vmatprep.subr.mxu0 0.0
    %130 = vmatpush1.msra.mxu0 %v100
    %131 = vmatprep.subr.mxu0 0.0
    %132 = vmatpush1.msra.mxu0 %v101
    %133 = vmatprep.subr.mxu0 0.0
    %134 = vmatpush1.msra.mxu0 %v102
    %135 = vmatprep.subr.mxu0 0.0
    %136 = vmatpush1.msra.mxu0 %v103
    %137 = vmatprep.subr.mxu0 0.0
    %138 = vmatpush1.msra.mxu0 %v104
    %139 = vmatprep.subr.mxu0 0.0
    %140 = vmatpush1.msra.mxu0 %v105
    %141 = vmatprep.subr.mxu0 0.0
    %142 = vmatpush1.msra.mxu0 %v106
    %143 = vmatprep.subr.mxu0 0.0
    %144 = vmatpush1.msra.mxu0 %v107
    %145 = vmatprep.subr.mxu0 0.0
    %146 = vmatpush1.msra.mxu0 0.0
    %147 = vmatprep.subr.mxu0 0.0
    %148 = vmatpush1.msra.mxu0 0.0
    %149 = vmatprep.subr.mxu0 0.0
    %150 = vmatpush1.msra.mxu0 0.0
    %151 = vmatprep.subr.mxu0 0.0
    %152 = vmatpush1.msra.mxu0 0.0
    %153 = vmatprep.subr.mxu0 0.0
    %154 = vmatpush1.msra.mxu0 0.0
    %155 = vmatprep.subr.mxu0 0.0
    %156 = vmatpush1.msra.mxu0 0.0
    %157 = vmatprep.subr.mxu0 0.0
    %158 = vmatpush1.msra.mxu0 0.0
    %159 = vmatprep.subr.mxu0 0.0
    %160 = vmatpush1.msra.mxu0 0.0
    %161 = vmatprep.subr.mxu0 0.0
    %162 = vmatpush1.msra.mxu0 0.0
    %163 = vmatprep.subr.mxu0 0.0
    %164 = vmatpush1.msra.mxu0 0.0
    %165 = vmatprep.subr.mxu0 0.0
    %166 = vmatpush1.msra.mxu0 0.0
    %167 = vmatprep.subr.mxu0 0.0
    %168 = vmatpush1.msra.mxu0 0.0
    %169 = vmatprep.subr.mxu0 0.0
    %170 = vmatpush1.msra.mxu0 0.0
    %171 = vmatprep.subr.mxu0 0.0
    %172 = vmatpush1.msra.mxu0 0.0
    %173 = vmatprep.subr.mxu0 0.0
    %174 = vmatpush1.msra.mxu0 0.0
    %175 = vmatprep.subr.mxu0 0.0
    %176 = vmatpush1.msra.mxu0 0.0
    %177 = vmatprep.mubr.f32.mxu0 0.0
    %178 = vmatmul.mubr.f32.gmra.mrb[0].mxu0 %v91
    %v179 = vpop.f32.mrb[0].mxu0
    %v180 = vadd.f32 %v112, %v179
    %v181 = vpop.f32.mrb[0].mxu0
    %182 = vdwg.mxu0
    %v183 = vtanh.pop %v180
    %v184 = vld [vmem:[#allocation8] sm:$0xff]
    %v185 = vld [vmem:[#allocation8 + $0x8] sm:$0xff]
    %v186 = vld [vmem:[#allocation8 + $0x10] sm:$0xff]
    %v187 = vld [vmem:[#allocation8 + $0x18] sm:$0xff]
    %v188 = vld [vmem:[#allocation8 + $0x20] sm:$0xff]
    %v189 = vld [vmem:[#allocation8 + $0x28] sm:$0xff]
    %v190 = vld [vmem:[#allocation8 + $0x30] sm:$0xff]
    %v191 = vld [vmem:[#allocation8 + $0x38] sm:$0xff]
    %v192 = vld [vmem:[#allocation8 + $0x40] sm:$0xff]
    %v193 = vld [vmem:[#allocation8 + $0x48] sm:$0xff]
    %v194 = vld [vmem:[#allocation8 + $0x50] sm:$0xff]
    %v195 = vld [vmem:[#allocation8 + $0x58] sm:$0xff]
    %v196 = vld [vmem:[#allocation8 + $0x60] sm:$0xff]
    %v197 = vld [vmem:[#allocation8 + $0x68] sm:$0xff]
    %v198 = vld [vmem:[#allocation8 + $0x70] sm:$0xff]
    %v199 = vld [vmem:[#allocation8 + $0x78] sm:$0xff]
    %v200 = vld [vmem:[%s4] sm:$0xff]
    %v201 = vlaneseq
    %v202 = vshrl.u32 %v201, 7
    %v203 = vsub.s32 0, %v202
    %v204 = vrot.slane %v200, %v203
    %205 = vmatprep.subr.mxu0 0.0
    %206 = vmatpush1.msra.mxu0 %v184
    %207 = vmatprep.subr.mxu0 0.0
    %208 = vmatpush1.msra.mxu0 %v185
    %209 = vmatprep.subr.mxu0 0.0
    %210 = vmatpush1.msra.mxu0 %v186
    %211 = vmatprep.subr.mxu0 0.0
    %212 = vmatpush1.msra.mxu0 %v187
    %213 = vmatprep.subr.mxu0 0.0
    %214 = vmatpush1.msra.mxu0 %v188
    %215 = vmatprep.subr.mxu0 0.0
    %216 = vmatpush1.msra.mxu0 %v189
    %217 = vmatprep.subr.mxu0 0.0
    %218 = vmatpush1.msra.mxu0 %v190
    %219 = vmatprep.subr.mxu0 0.0
    %220 = vmatpush1.msra.mxu0 %v191
    %221 = vmatprep.subr.mxu0 0.0
    %222 = vmatpush1.msra.mxu0 %v192
    %223 = vmatprep.subr.mxu0 0.0
    %224 = vmatpush1.msra.mxu0 %v193
    %225 = vmatprep.subr.mxu0 0.0
    %226 = vmatpush1.msra.mxu0 %v194
    %227 = vmatprep.subr.mxu0 0.0
    %228 = vmatpush1.msra.mxu0 %v195
    %229 = vmatprep.subr.mxu0 0.0
    %230 = vmatpush1.msra.mxu0 %v196
    %231 = vmatprep.subr.mxu0 0.0
    %232 = vmatpush1.msra.mxu0 %v197
    %233 = vmatprep.subr.mxu0 0.0
    %234 = vmatpush1.msra.mxu0 %v198
    %235 = vmatprep.subr.mxu0 0.0
    %236 = vmatpush1.msra.mxu0 %v199
    %237 = vmatprep.subr.mxu0 0.0
    %238 = vmatpush1.msra.mxu0 0.0
    %239 = vmatprep.subr.mxu0 0.0
    %240 = vmatpush1.msra.mxu0 0.0
    %241 = vmatprep.subr.mxu0 0.0
    %242 = vmatpush1.msra.mxu0 0.0
    %243 = vmatprep.subr.mxu0 0.0
    %244 = vmatpush1.msra.mxu0 0.0
    %245 = vmatprep.subr.mxu0 0.0
    %246 = vmatpush1.msra.mxu0 0.0
    %247 = vmatprep.subr.mxu0 0.0
    %248 = vmatpush1.msra.mxu0 0.0
    %249 = vmatprep.subr.mxu0 0.0
    %250 = vmatpush1.msra.mxu0 0.0
    %251 = vmatprep.subr.mxu0 0.0
    %252 = vmatpush1.msra.mxu0 0.0
    %253 = vmatprep.subr.mxu0 0.0
    %254 = vmatpush1.msra.mxu0 0.0
    %255 = vmatprep.subr.mxu0 0.0
    %256 = vmatpush1.msra.mxu0 0.0
    %257 = vmatprep.subr.mxu0 0.0
    %258 = vmatpush1.msra.mxu0 0.0
    %259 = vmatprep.subr.mxu0 0.0
    %260 = vmatpush1.msra.mxu0 0.0
    %261 = vmatprep.subr.mxu0 0.0
    %262 = vmatpush1.msra.mxu0 0.0
    %263 = vmatprep.subr.mxu0 0.0
    %264 = vmatpush1.msra.mxu0 0.0
    %265 = vmatprep.subr.mxu0 0.0
    %266 = vmatpush1.msra.mxu0 0.0
    %267 = vmatprep.subr.mxu0 0.0
    %268 = vmatpush1.msra.mxu0 0.0
    %269 = vmatprep.mubr.f32.mxu0 0.0
    %270 = vmatmul.mubr.f32.gmra.mrb[0].mxu0 %v183
    %v271 = vpop.f32.mrb[0].mxu0
    %v272 = vadd.f32 %v204, %v271
    %v273 = vpop.f32.mrb[0].mxu0
    %274 = vdwg.mxu0
    %v275 = vtanh.pop %v272
    %v276 = vld [vmem:[#allocation10] sm:$0xff]
    %v277 = vld [vmem:[#allocation10 + $0x8] sm:$0xff]
    %v278 = vld [vmem:[#allocation10 + $0x10] sm:$0xff]
    %v279 = vld [vmem:[#allocation10 + $0x18] sm:$0xff]
    %v280 = vld [vmem:[#allocation10 + $0x20] sm:$0xff]
    %v281 = vld [vmem:[#allocation10 + $0x28] sm:$0xff]
    %v282 = vld [vmem:[#allocation10 + $0x30] sm:$0xff]
    %v283 = vld [vmem:[#allocation10 + $0x38] sm:$0xff]
    %v284 = vld [vmem:[#allocation10 + $0x40] sm:$0xff]
    %v285 = vld [vmem:[#allocation10 + $0x48] sm:$0xff]
    %v286 = vld [vmem:[#allocation10 + $0x50] sm:$0xff]
    %v287 = vld [vmem:[#allocation10 + $0x58] sm:$0xff]
    %v288 = vld [vmem:[#allocation10 + $0x60] sm:$0xff]
    %v289 = vld [vmem:[#allocation10 + $0x68] sm:$0xff]
    %v290 = vld [vmem:[#allocation10 + $0x70] sm:$0xff]
    %v291 = vld [vmem:[#allocation10 + $0x78] sm:$0xff]
    %v292 = vld [vmem:[%s6] sm:$0xff]
    %v293 = vlaneseq
    %v294 = vshrl.u32 %v293, 7
    %v295 = vsub.s32 0, %v294
    %v296 = vrot.slane %v292, %v295
    %297 = vmatprep.subr.mxu0 0.0
    %298 = vmatpush1.msra.mxu0 %v276
    %299 = vmatprep.subr.mxu0 0.0
    %300 = vmatpush1.msra.mxu0 %v277
    %301 = vmatprep.subr.mxu0 0.0
    %302 = vmatpush1.msra.mxu0 %v278
    %303 = vmatprep.subr.mxu0 0.0
    %304 = vmatpush1.msra.mxu0 %v279
    %305 = vmatprep.subr.mxu0 0.0
    %306 = vmatpush1.msra.mxu0 %v280
    %307 = vmatprep.subr.mxu0 0.0
    %308 = vmatpush1.msra.mxu0 %v281
    %309 = vmatprep.subr.mxu0 0.0
    %310 = vmatpush1.msra.mxu0 %v282
    %311 = vmatprep.subr.mxu0 0.0
    %312 = vmatpush1.msra.mxu0 %v283
    %313 = vmatprep.subr.mxu0 0.0
    %314 = vmatpush1.msra.mxu0 %v284
    %315 = vmatprep.subr.mxu0 0.0
    %316 = vmatpush1.msra.mxu0 %v285
    %317 = vmatprep.subr.mxu0 0.0
    %318 = vmatpush1.msra.mxu0 %v286
    %319 = vmatprep.subr.mxu0 0.0
    %320 = vmatpush1.msra.mxu0 %v287
    %321 = vmatprep.subr.mxu0 0.0
    %322 = vmatpush1.msra.mxu0 %v288
    %323 = vmatprep.subr.mxu0 0.0
    %324 = vmatpush1.msra.mxu0 %v289
    %325 = vmatprep.subr.mxu0 0.0
    %326 = vmatpush1.msra.mxu0 %v290
    %327 = vmatprep.subr.mxu0 0.0
    %328 = vmatpush1.msra.mxu0 %v291
    %329 = vmatprep.subr.mxu0 0.0
    %330 = vmatpush1.msra.mxu0 0.0
    %331 = vmatprep.subr.mxu0 0.0
    %332 = vmatpush1.msra.mxu0 0.0
    %333 = vmatprep.subr.mxu0 0.0
    %334 = vmatpush1.msra.mxu0 0.0
    %335 = vmatprep.subr.mxu0 0.0
    %336 = vmatpush1.msra.mxu0 0.0
    %337 = vmatprep.subr.mxu0 0.0
    %338 = vmatpush1.msra.mxu0 0.0
    %339 = vmatprep.subr.mxu0 0.0
    %340 = vmatpush1.msra.mxu0 0.0
    %341 = vmatprep.subr.mxu0 0.0
    %342 = vmatpush1.msra.mxu0 0.0
    %343 = vmatprep.subr.mxu0 0.0
    %344 = vmatpush1.msra.mxu0 0.0
    %345 = vmatprep.subr.mxu0 0.0
    %346 = vmatpush1.msra.mxu0 0.0
    %347 = vmatprep.subr.mxu0 0.0
    %348 = vmatpush1.msra.mxu0 0.0
    %349 = vmatprep.subr.mxu0 0.0
    %350 = vmatpush1.msra.mxu0 0.0
    %351 = vmatprep.subr.mxu0 0.0
    %352 = vmatpush1.msra.mxu0 0.0
    %353 = vmatprep.subr.mxu0 0.0
    %354 = vmatpush1.msra.mxu0 0.0
    %355 = vmatprep.subr.mxu0 0.0
    %356 = vmatpush1.msra.mxu0 0.0
    %357 = vmatprep.subr.mxu0 0.0
    %358 = vmatpush1.msra.mxu0 0.0
    %359 = vmatprep.subr.mxu0 0.0
    %360 = vmatpush1.msra.mxu0 0.0
    %361 = vmatprep.mubr.f32.mxu0 0.0
    %362 = vmatmul.mubr.f32.gmra.mrb[0].mxu0 %v275
    %v363 = vpop.f32.mrb[0].mxu0
    %v364 = vadd.f32 %v296, %v363
    %v365 = vpop.f32.mrb[0].mxu0
    %366 = vdwg.mxu0
    %367 = vst [vmem:[#allocation11] sm:$0xff] %v364
    // Predicated region
    $region50: #{tpu_custom_call.1} parent=1 // pred_check
      _
    $region51: #{tpu_custom_call.1} parent=1 // pred_check_branch
      %369 = sbr.rel (0) target = $region53
    $region52: #{tpu_custom_call.1} parent=1 // pred_region
      %s371 = ssub.s32 128, 128
      %372 = vsyncadd [#allocation4], %s371
      %s374 = sshll.u32 [#allocation11], 4
      %s375 = int_to_ptr.vmem [resolvable:$true] %s374
      %377 = dma.vmem_to_hbm [thread:$0]  %s375, 128, %s7, [#allocation4]
    $region53: #{tpu_custom_call.1} parent=1 // pred_fallthru
      _
    // Predicated region
    $region54: #{tpu_custom_call.1} parent=1 // pred_check
      _
    $region55: #{tpu_custom_call.1} parent=1 // pred_check_branch
      %379 = sbr.rel (0) target = $region57
    $region56: #{tpu_custom_call.1} parent=1 // pred_region
      %380 = dma.done [#allocation4], 128
    $region57: #{tpu_custom_call.1} parent=1 // pred_fallthru
      _
    %381 = vsyncpa [#allocation3], 1
    %382 = vsyncpa [#allocation6], 1
    %383 = vsyncpa [#allocation9], 1
    %384 = vsyncpa [#allocation4], 1

</llo_original>
